<compile_context>
chip_gen: v6e
topology: v6e:2x2x1
jax: 0.10.0
libtpu: 0.0.40
codegen_flags: <defaults>
</compile_context>

<pallas_src>
import jax
import jax.numpy as jnp
from jax import lax
from jax.experimental import pallas as pl
from jax.experimental.pallas import tpu as pltpu

_LANES = 128
_MAX_BLOCK_ROWS = 4096      # 4096*128*4 B = 2 MiB per input per block
_PAD_LOGIT = -1.0e4         # sigmoid(pad) == 0 and softplus(pad) == 0 exactly in f32


def _num_tensorcores():
    """2 only on chips exposing two TensorCores to one Pallas program (v4/v5p megacore, v7x)."""
    try:
        dev = jax.devices()[0]
        if dev.platform != "tpu":
            return 1
        kind = str(getattr(dev, "device_kind", "")).lower()
    except Exception:
        return 1
    return 2 if ("v4" in kind or "v5p" in kind or "v7" in kind) else 1


def _make_reduce_kernel(rows, block_rows, sub, blocks_per_core, mask_needed):
    """Kernel accumulating six lane-packed partial sums into an out_ref of shape (6, 8, 128)."""
    nsub = block_rows // sub

    def kernel(x_ref, t_ref, out_ref):
        @pl.when(pl.program_id(1) == 0)
        def _():
            out_ref[...] = jnp.zeros_like(out_ref)

        if mask_needed:
            base_row = (pl.program_id(0) * blocks_per_core + pl.program_id(1)) * block_rows

        def body(s, acc):
            off = pl.multiple_of(s * sub, sub)
            x = x_ref[pl.ds(off, sub), :].astype(jnp.float32)
            t = t_ref[pl.ds(off, sub), :].astype(jnp.float32)
            if mask_needed:
                # Rows at/after `rows` are garbage from a partial/out-of-range block: replace
                # them (before any arithmetic) with pad values that contribute exactly zero.
                limit = rows - (base_row + s * sub)
                row_id = lax.broadcasted_iota(jnp.int32, (sub, _LANES), 0)
                keep = row_id < limit
                x = jnp.where(keep, x, _PAD_LOGIT)
                t = jnp.where(keep, t, 0.0)

            # Numerically stable sigmoid / softplus with shared transcendentals:
            #   e = exp(-|x|);  p = sigmoid(x);  softplus(x) = max(x,0) + log1p(e)
            e = jnp.exp(-jnp.abs(x))                 # EUP exp (shared)
            lp1 = jnp.log1p(e)                       # EUP log1p (shared by both BCE logs)
            d = 1.0 + e
            r = pl.reciprocal(d, approx=True)        # EUP approx recip ...
            r = r * (2.0 - d * r)                    # ... + one Newton step (~1e-7 rel error)
            p = jnp.where(x >= 0.0, r, e * r)        # sigmoid(x)

            # BCE with torch's log-clamp at -100:
            #   -log(1-p) = softplus(x), -log(p) = softplus(-x) = softplus(x) - x
            sp_pos = jnp.maximum(x, 0.0) + lp1
            sp_neg = sp_pos - x
            la = jnp.minimum(sp_pos, 100.0)
            lb = jnp.minimum(sp_neg, 100.0)
            bce = la + t * (lb - la)

            def fold(v):
                # (sub,128) -> (sub//8, 8, 128); sum the leading (vreg-count) axis only:
                # pure VPU adds, no cross-sublane/lane work in the loop.
                return jnp.sum(v.reshape(sub // 8, 8, _LANES), axis=0)

            s_p, s_t, s_pt, s_pp, s_tt, s_bce = acc
            return (s_p + fold(p), s_t + fold(t), s_pt + fold(p * t),
                    s_pp + fold(p * p), s_tt + fold(t * t), s_bce + fold(bce))

        zero = jnp.zeros((8, _LANES), jnp.float32)
        acc = lax.fori_loop(0, nsub, body, (zero,) * 6, unroll=2)
        for j in range(6):
            out_ref[j] += acc[j]

    return kernel


def _partial_sums(x2, t2, block_rows, ncores):
    rows = x2.shape[0]
    blocks_total = -(-rows // block_rows)
    blocks_per_core = -(-blocks_total // ncores)
    coverage_rows = ncores * blocks_per_core * block_rows
    mask_needed = coverage_rows != rows
    sub = 32 if block_rows % 32 == 0 else 8

    if ncores * blocks_per_core > blocks_total:
        # Some grid blocks would start past the array: clamp their DMA source to the last
        # valid block (the in-kernel row mask zeroes their contribution).
        def bidx(c, i):
            return jnp.minimum(c * blocks_per_core + i, blocks_total - 1)
    else:
        def bidx(c, i):
            return c * blocks_per_core + i

    kernel = _make_reduce_kernel(rows, block_rows, sub, blocks_per_core, mask_needed)

    n_elems = rows * _LANES
    cost = pl.CostEstimate(
        flops=32 * n_elems,
        transcendentals=3 * n_elems,
        bytes_accessed=int(x2.size * x2.dtype.itemsize
                           + t2.size * t2.dtype.itemsize
                           + ncores * 6 * 8 * _LANES * 4),
    )

    return pl.pallas_call(
        kernel,
        out_shape=jax.ShapeDtypeStruct((ncores, 6, 8, _LANES), jnp.float32),
        grid=(ncores, blocks_per_core),
        in_specs=[
            pl.BlockSpec((block_rows, _LANES), lambda c, i: (bidx(c, i), 0)),
            pl.BlockSpec((block_rows, _LANES), lambda c, i: (bidx(c, i), 0)),
        ],
        out_specs=pl.BlockSpec((None, 6, 8, _LANES), lambda c, i: (c, 0, 0, 0)),
        compiler_params=pltpu.CompilerParams(
            # TODO(synk): on v7x, pltpu.CORE_PARALLEL on the leading axis may engage the
            # 2-TC split more aggressively than PARALLEL; PARALLEL kept for portability.
            dimension_semantics=(pltpu.PARALLEL, pltpu.ARBITRARY),
        ),
        cost_estimate=cost,
    )(x2, t2)


@jax.jit
def omni_comprehensive_loss(inputs, targets):
    """JAX/Pallas equivalent of omni_comprehensive_loss.forward(inputs, targets)."""
    x = jnp.reshape(inputs, (-1,))
    t = jnp.reshape(targets, (-1,))
    # Stream floating inputs in their native dtype (f32/bf16) and upcast in-kernel.
    if not jnp.issubdtype(x.dtype, jnp.floating):
        x = x.astype(jnp.float32)
    if not jnp.issubdtype(t.dtype, jnp.floating):
        t = t.astype(jnp.float32)
    n = x.shape[0]

    # Pad (full copy) ONLY when n is not a multiple of 128, and then only to the next
    # lane boundary; the common case reshapes the original buffers for free.
    rem = n % _LANES
    if rem:
        pad = _LANES - rem
        x = jnp.pad(x, (0, pad), constant_values=_PAD_LOGIT)  # sigmoid->0, softplus->0
        t = jnp.pad(t, (0, pad))
    x2 = jnp.reshape(x, (-1, _LANES))
    t2 = jnp.reshape(t, (-1, _LANES))
    rows = x2.shape[0]

    block_rows = min(_MAX_BLOCK_ROWS, ((rows + 7) // 8) * 8)
    blocks_total = -(-rows // block_rows)
    ncores = _num_tensorcores() if blocks_total >= 2 else 1

    out = _partial_sums(x2, t2, block_rows, ncores)            # (ncores, 6, 8, 128)
    sums = jnp.sum(out, axis=(0, 2, 3))                        # (6,) final reduce (glue)
    s_p, s_t, s_pt, s_pp, s_tt, s_bce = sums

    nf = jnp.float32(n)

    # BCE (mean reduction)
    bce_mean = s_bce / nf

    # ncc: c = (p - p.mean()) / (p.std() * N); d = (t - t.mean()) / t.std()
    # np.correlate(c, d, 'valid') for equal-length vectors == sum(c * d);
    # torch .std() is unbiased (ddof = 1).  Variances clamped at 0 against cancellation.
    mean_p = s_p / nf
    mean_t = s_t / nf
    var_p = jnp.maximum((s_pp - nf * mean_p * mean_p) / (nf - 1.0), 0.0)
    var_t = jnp.maximum((s_tt - nf * mean_t * mean_t) / (nf - 1.0), 0.0)
    std_p = jnp.sqrt(var_p)
    std_t = jnp.sqrt(var_t)
    cov_sum = s_pt - nf * mean_p * mean_t
    ncc_val = cov_sum / (std_p * nf * std_t)

    # Tversky index, smooth=0.1, beta=0.1
    tp = s_pt
    fp = s_p - s_pt
    fn = s_t - s_pt
    tversky = tp / (tp + 0.1 * fp + 0.9 * fn + 0.1)

    alpha = 0.5
    return (1.0 - (alpha * ncc_val + (1.0 - alpha) * tversky)) * bce_mean


if __name__ == "__main__":
    key = jax.random.PRNGKey(0)
    k1, k2 = jax.random.split(key)
    # logits (pre-sigmoid) and binary targets, shape (2, 4, 16, 16)
    inputs = jax.random.normal(k1, (2, 4, 16, 16), dtype=jnp.float32)
    targets = jax.random.bernoulli(k2, 0.5, (2, 4, 16, 16)).astype(jnp.float32)

    loss = omni_comprehensive_loss(inputs, targets)
    jax.block_until_ready(loss)

    # quick sanity check against a pure-JAX reference of the torch formula
    p = jax.nn.sigmoid(inputs.reshape(-1))
    t = targets.reshape(-1)
    n = p.shape[0]
    bce_ref = jnp.mean(-(t * jnp.maximum(jnp.log(p), -100.0)
                         + (1 - t) * jnp.maximum(jnp.log1p(-p), -100.0)))
    std_p = jnp.std(p, ddof=1)
    std_t = jnp.std(t, ddof=1)
    c = (p - p.mean()) / (std_p * n)
    d = (t - t.mean()) / std_t
    ncc_ref = jnp.sum(c * d)
    tp = jnp.sum(p * t)
    fp = jnp.sum((1 - t) * p)
    fn = jnp.sum(t * (1 - p))
    tv_ref = tp / (tp + 0.1 * fp + 0.9 * fn + 0.1)
    ref = (1.0 - (0.5 * ncc_ref + 0.5 * tv_ref)) * bce_ref

    assert jnp.allclose(loss, ref, rtol=1e-5, atol=1e-5), (loss, ref)
    print("KERNEL_OK")
</pallas_src>

<mosaic_0001>
module attributes {stable_mosaic.version = 11 : i64} {
  func.func @kernel(%arg0: i32, %arg1: i32, %arg2: memref<16x128xf32, #tpu.memory_space<vmem>>, %arg3: memref<16x128xf32, #tpu.memory_space<vmem>>, %arg4: memref<1x6x8x128xf32, #tpu.memory_space<vmem>>) attributes {dimension_semantics = [#tpu.dimension_semantics<parallel>, #tpu.dimension_semantics<arbitrary>], iteration_bounds = array<i64: 1, 1>, scalar_prefetch = 0 : i64, scratch_operands = 0 : i64, tpu.core_type = #tpu.core_type<tc>, window_params = [{transform_indices = @transform_0, window_bounds = array<i64: 16, 128>}, {transform_indices = @transform_1, window_bounds = array<i64: 16, 128>}, {transform_indices = @transform_2, window_bounds = array<i64: 1, 6, 8, 128>}]} {
    %c0_i32 = arith.constant 0 : i32
    %0 = arith.cmpi eq, %arg1, %c0_i32 : i32
    %1 = arith.extui %0 : i1 to i32
    %c0_i32_0 = arith.constant 0 : i32
    %2 = arith.cmpi ne, %1, %c0_i32_0 : i32
    scf.if %2 {
      %cst_75 = arith.constant 0.000000e+00 : f32
      %148 = vector.broadcast %cst_75 : f32 to vector<6x8x128xf32>
      %c0_76 = arith.constant 0 : index
      %c0_77 = arith.constant 0 : index
      %c0_78 = arith.constant 0 : index
      %c0_79 = arith.constant 0 : index
      %149 = vector.load %arg4[%c0_76, %c0_77, %c0_78, %c0_79] : memref<1x6x8x128xf32, #tpu.memory_space<vmem>>, vector<1x6x8x128xf32>
      %150 = vector.shape_cast %149 : vector<1x6x8x128xf32> to vector<6x8x128xf32>
      %151 = vector.shape_cast %148 : vector<6x8x128xf32> to vector<1x6x8x128xf32>
      tpu.vector_store %arg4[%c0_76, %c0_77, %c0_78, %c0_79], %151 {strides = array<i32>} : memref<1x6x8x128xf32, #tpu.memory_space<vmem>>, vector<1x6x8x128xf32>,
    } else {
    }
    %cst = arith.constant 0.000000e+00 : f32
    %3 = vector.broadcast %cst : f32 to vector<8x128xf32>
    %c0_i32_1 = arith.constant 0 : i32
    %c8_i32 = arith.constant 8 : i32
    %4 = arith.muli %c0_i32_1, %c8_i32 : i32
    %5 = tpu.assume_multiple %4, 8 : i32
    %6 = arith.index_cast %5 : i32 to index
    %c0 = arith.constant 0 : index
    %7 = vector.load %arg2[%6, %c0] : memref<16x128xf32, #tpu.memory_space<vmem>>, vector<8x128xf32>
    %8 = arith.index_cast %5 : i32 to index
    %c0_2 = arith.constant 0 : index
    %9 = vector.load %arg3[%8, %c0_2] : memref<16x128xf32, #tpu.memory_space<vmem>>, vector<8x128xf32>
    %10 = math.absf %7 : vector<8x128xf32>
    %cst_3 = arith.constant 0.000000e+00 : f32
    %11 = vector.broadcast %cst_3 : f32 to vector<8x128xf32>
    %12 = arith.subf %11, %10 : vector<8x128xf32>
    %13 = math.exp %12 : vector<8x128xf32>
    %14 = math.log1p %13 : vector<8x128xf32>
    %cst_4 = arith.constant 1.000000e+00 : f32
    %15 = vector.broadcast %cst_4 : f32 to vector<8x128xf32>
    %16 = arith.addf %15, %13 : vector<8x128xf32>
    %17 = tpu.reciprocal %16 {approx = true} : vector<8x128xf32> -> vector<8x128xf32>
    %18 = arith.mulf %16, %17 : vector<8x128xf32>
    %cst_5 = arith.constant 2.000000e+00 : f32
    %19 = vector.broadcast %cst_5 : f32 to vector<8x128xf32>
    %20 = arith.subf %19, %18 : vector<8x128xf32>
    %21 = arith.mulf %17, %20 : vector<8x128xf32>
    %cst_6 = arith.constant 0.000000e+00 : f32
    %22 = vector.broadcast %cst_6 : f32 to vector<8x128xf32>
    %23 = arith.cmpf oge, %7, %22 : vector<8x128xf32>
    %24 = arith.mulf %13, %21 : vector<8x128xf32>
    %25 = arith.select %23, %21, %24 : vector<8x128xi1>, vector<8x128xf32>
    %cst_7 = arith.constant 0.000000e+00 : f32
    %26 = vector.broadcast %cst_7 : f32 to vector<8x128xf32>
    %27 = arith.maximumf %7, %26 : vector<8x128xf32>
    %28 = arith.addf %27, %14 : vector<8x128xf32>
    %29 = arith.subf %28, %7 : vector<8x128xf32>
    %cst_8 = arith.constant 1.000000e+02 : f32
    %30 = vector.broadcast %cst_8 : f32 to vector<8x128xf32>
    %31 = arith.minimumf %28, %30 : vector<8x128xf32>
    %cst_9 = arith.constant 1.000000e+02 : f32
    %32 = vector.broadcast %cst_9 : f32 to vector<8x128xf32>
    %33 = arith.minimumf %29, %32 : vector<8x128xf32>
    %34 = arith.subf %33, %31 : vector<8x128xf32>
    %35 = arith.mulf %9, %34 : vector<8x128xf32>
    %36 = arith.addf %31, %35 : vector<8x128xf32>
    %37 = vector.shape_cast %25 : vector<8x128xf32> to vector<1x8x128xf32>
    %cst_10 = arith.constant dense<0.000000e+00> : vector<8x128xf32>
    %38 = vector.multi_reduction <add>, %37, %cst_10 [0] : vector<1x8x128xf32> to vector<8x128xf32>
    %39 = arith.addf %3, %38 : vector<8x128xf32>
    %40 = vector.shape_cast %9 : vector<8x128xf32> to vector<1x8x128xf32>
    %cst_11 = arith.constant dense<0.000000e+00> : vector<8x128xf32>
    %41 = vector.multi_reduction <add>, %40, %cst_11 [0] : vector<1x8x128xf32> to vector<8x128xf32>
    %42 = arith.addf %3, %41 : vector<8x128xf32>
    %43 = arith.mulf %25, %9 : vector<8x128xf32>
    %44 = vector.shape_cast %43 : vector<8x128xf32> to vector<1x8x128xf32>
    %cst_12 = arith.constant dense<0.000000e+00> : vector<8x128xf32>
    %45 = vector.multi_reduction <add>, %44, %cst_12 [0] : vector<1x8x128xf32> to vector<8x128xf32>
    %46 = arith.addf %3, %45 : vector<8x128xf32>
    %47 = arith.mulf %25, %25 : vector<8x128xf32>
    %48 = vector.shape_cast %47 : vector<8x128xf32> to vector<1x8x128xf32>
    %cst_13 = arith.constant dense<0.000000e+00> : vector<8x128xf32>
    %49 = vector.multi_reduction <add>, %48, %cst_13 [0] : vector<1x8x128xf32> to vector<8x128xf32>
    %50 = arith.addf %3, %49 : vector<8x128xf32>
    %51 = arith.mulf %9, %9 : vector<8x128xf32>
    %52 = vector.shape_cast %51 : vector<8x128xf32> to vector<1x8x128xf32>
    %cst_14 = arith.constant dense<0.000000e+00> : vector<8x128xf32>
    %53 = vector.multi_reduction <add>, %52, %cst_14 [0] : vector<1x8x128xf32> to vector<8x128xf32>
    %54 = arith.addf %3, %53 : vector<8x128xf32>
    %55 = vector.shape_cast %36 : vector<8x128xf32> to vector<1x8x128xf32>
    %cst_15 = arith.constant dense<0.000000e+00> : vector<8x128xf32>
    %56 = vector.multi_reduction <add>, %55, %cst_15 [0] : vector<1x8x128xf32> to vector<8x128xf32>
    %57 = arith.addf %3, %56 : vector<8x128xf32>
    %c1_i32 = arith.constant 1 : i32
    %c8_i32_16 = arith.constant 8 : i32
    %58 = arith.muli %c1_i32, %c8_i32_16 : i32
    %59 = tpu.assume_multiple %58, 8 : i32
    %60 = arith.index_cast %59 : i32 to index
    %c0_17 = arith.constant 0 : index
    %61 = vector.load %arg2[%60, %c0_17] : memref<16x128xf32, #tpu.memory_space<vmem>>, vector<8x128xf32>
    %62 = arith.index_cast %59 : i32 to index
    %c0_18 = arith.constant 0 : index
    %63 = vector.load %arg3[%62, %c0_18] : memref<16x128xf32, #tpu.memory_space<vmem>>, vector<8x128xf32>
    %64 = math.absf %61 : vector<8x128xf32>
    %cst_19 = arith.constant 0.000000e+00 : f32
    %65 = vector.broadcast %cst_19 : f32 to vector<8x128xf32>
    %66 = arith.subf %65, %64 : vector<8x128xf32>
    %67 = math.exp %66 : vector<8x128xf32>
    %68 = math.log1p %67 : vector<8x128xf32>
    %cst_20 = arith.constant 1.000000e+00 : f32
    %69 = vector.broadcast %cst_20 : f32 to vector<8x128xf32>
    %70 = arith.addf %69, %67 : vector<8x128xf32>
    %71 = tpu.reciprocal %70 {approx = true} : vector<8x128xf32> -> vector<8x128xf32>
    %72 = arith.mulf %70, %71 : vector<8x128xf32>
    %cst_21 = arith.constant 2.000000e+00 : f32
    %73 = vector.broadcast %cst_21 : f32 to vector<8x128xf32>
    %74 = arith.subf %73, %72 : vector<8x128xf32>
    %75 = arith.mulf %71, %74 : vector<8x128xf32>
    %cst_22 = arith.constant 0.000000e+00 : f32
    %76 = vector.broadcast %cst_22 : f32 to vector<8x128xf32>
    %77 = arith.cmpf oge, %61, %76 : vector<8x128xf32>
    %78 = arith.mulf %67, %75 : vector<8x128xf32>
    %79 = arith.select %77, %75, %78 : vector<8x128xi1>, vector<8x128xf32>
    %cst_23 = arith.constant 0.000000e+00 : f32
    %80 = vector.broadcast %cst_23 : f32 to vector<8x128xf32>
    %81 = arith.maximumf %61, %80 : vector<8x128xf32>
    %82 = arith.addf %81, %68 : vector<8x128xf32>
    %83 = arith.subf %82, %61 : vector<8x128xf32>
    %cst_24 = arith.constant 1.000000e+02 : f32
    %84 = vector.broadcast %cst_24 : f32 to vector<8x128xf32>
    %85 = arith.minimumf %82, %84 : vector<8x128xf32>
    %cst_25 = arith.constant 1.000000e+02 : f32
    %86 = vector.broadcast %cst_25 : f32 to vector<8x128xf32>
    %87 = arith.minimumf %83, %86 : vector<8x128xf32>
    %88 = arith.subf %87, %85 : vector<8x128xf32>
    %89 = arith.mulf %63, %88 : vector<8x128xf32>
    %90 = arith.addf %85, %89 : vector<8x128xf32>
    %91 = vector.shape_cast %79 : vector<8x128xf32> to vector<1x8x128xf32>
    %cst_26 = arith.constant dense<0.000000e+00> : vector<8x128xf32>
    %92 = vector.multi_reduction <add>, %91, %cst_26 [0] : vector<1x8x128xf32> to vector<8x128xf32>
    %93 = arith.addf %39, %92 : vector<8x128xf32>
    %94 = vector.shape_cast %63 : vector<8x128xf32> to vector<1x8x128xf32>
    %cst_27 = arith.constant dense<0.000000e+00> : vector<8x128xf32>
    %95 = vector.multi_reduction <add>, %94, %cst_27 [0] : vector<1x8x128xf32> to vector<8x128xf32>
    %96 = arith.addf %42, %95 : vector<8x128xf32>
    %97 = arith.mulf %79, %63 : vector<8x128xf32>
    %98 = vector.shape_cast %97 : vector<8x128xf32> to vector<1x8x128xf32>
    %cst_28 = arith.constant dense<0.000000e+00> : vector<8x128xf32>
    %99 = vector.multi_reduction <add>, %98, %cst_28 [0] : vector<1x8x128xf32> to vector<8x128xf32>
    %100 = arith.addf %46, %99 : vector<8x128xf32>
    %101 = arith.mulf %79, %79 : vector<8x128xf32>
    %102 = vector.shape_cast %101 : vector<8x128xf32> to vector<1x8x128xf32>
    %cst_29 = arith.constant dense<0.000000e+00> : vector<8x128xf32>
    %103 = vector.multi_reduction <add>, %102, %cst_29 [0] : vector<1x8x128xf32> to vector<8x128xf32>
    %104 = arith.addf %50, %103 : vector<8x128xf32>
    %105 = arith.mulf %63, %63 : vector<8x128xf32>
    %106 = vector.shape_cast %105 : vector<8x128xf32> to vector<1x8x128xf32>
    %cst_30 = arith.constant dense<0.000000e+00> : vector<8x128xf32>
    %107 = vector.multi_reduction <add>, %106, %cst_30 [0] : vector<1x8x128xf32> to vector<8x128xf32>
    %108 = arith.addf %54, %107 : vector<8x128xf32>
    %109 = vector.shape_cast %90 : vector<8x128xf32> to vector<1x8x128xf32>
    %cst_31 = arith.constant dense<0.000000e+00> : vector<8x128xf32>
    %110 = vector.multi_reduction <add>, %109, %cst_31 [0] : vector<1x8x128xf32> to vector<8x128xf32>
    %111 = arith.addf %57, %110 : vector<8x128xf32>
    %c2_i32 = arith.constant 2 : i32
    %c0_32 = arith.constant 0 : index
    %c0_33 = arith.constant 0 : index
    %c0_34 = arith.constant 0 : index
    %c0_35 = arith.constant 0 : index
    %112 = vector.load %arg4[%c0_32, %c0_33, %c0_34, %c0_35] : memref<1x6x8x128xf32, #tpu.memory_space<vmem>>, vector<1x1x8x128xf32>
    %113 = vector.shape_cast %112 : vector<1x1x8x128xf32> to vector<8x128xf32>
    %114 = arith.addf %113, %93 : vector<8x128xf32>
    %c0_36 = arith.constant 0 : index
    %c0_37 = arith.constant 0 : index
    %c0_38 = arith.constant 0 : index
    %c0_39 = arith.constant 0 : index
    %115 = vector.load %arg4[%c0_36, %c0_37, %c0_38, %c0_39] : memref<1x6x8x128xf32, #tpu.memory_space<vmem>>, vector<1x1x8x128xf32>
    %116 = vector.shape_cast %115 : vector<1x1x8x128xf32> to vector<8x128xf32>
    %117 = vector.shape_cast %114 : vector<8x128xf32> to vector<1x1x8x128xf32>
    tpu.vector_store %arg4[%c0_36, %c0_37, %c0_38, %c0_39], %117 {strides = array<i32>} : memref<1x6x8x128xf32, #tpu.memory_space<vmem>>, vector<1x1x8x128xf32>,
    %c0_40 = arith.constant 0 : index
    %c1 = arith.constant 1 : index
    %c0_41 = arith.constant 0 : index
    %c0_42 = arith.constant 0 : index
    %118 = vector.load %arg4[%c0_40, %c1, %c0_41, %c0_42] : memref<1x6x8x128xf32, #tpu.memory_space<vmem>>, vector<1x1x8x128xf32>
    %119 = vector.shape_cast %118 : vector<1x1x8x128xf32> to vector<8x128xf32>
    %120 = arith.addf %119, %96 : vector<8x128xf32>
    %c0_43 = arith.constant 0 : index
    %c1_44 = arith.constant 1 : index
    %c0_45 = arith.constant 0 : index
    %c0_46 = arith.constant 0 : index
    %121 = vector.load %arg4[%c0_43, %c1_44, %c0_45, %c0_46] : memref<1x6x8x128xf32, #tpu.memory_space<vmem>>, vector<1x1x8x128xf32>
    %122 = vector.shape_cast %121 : vector<1x1x8x128xf32> to vector<8x128xf32>
    %123 = vector.shape_cast %120 : vector<8x128xf32> to vector<1x1x8x128xf32>
    tpu.vector_store %arg4[%c0_43, %c1_44, %c0_45, %c0_46], %123 {strides = array<i32>} : memref<1x6x8x128xf32, #tpu.memory_space<vmem>>, vector<1x1x8x128xf32>,
    %c0_47 = arith.constant 0 : index
    %c2 = arith.constant 2 : index
    %c0_48 = arith.constant 0 : index
    %c0_49 = arith.constant 0 : index
    %124 = vector.load %arg4[%c0_47, %c2, %c0_48, %c0_49] : memref<1x6x8x128xf32, #tpu.memory_space<vmem>>, vector<1x1x8x128xf32>
    %125 = vector.shape_cast %124 : vector<1x1x8x128xf32> to vector<8x128xf32>
    %126 = arith.addf %125, %100 : vector<8x128xf32>
    %c0_50 = arith.constant 0 : index
    %c2_51 = arith.constant 2 : index
    %c0_52 = arith.constant 0 : index
    %c0_53 = arith.constant 0 : index
    %127 = vector.load %arg4[%c0_50, %c2_51, %c0_52, %c0_53] : memref<1x6x8x128xf32, #tpu.memory_space<vmem>>, vector<1x1x8x128xf32>
    %128 = vector.shape_cast %127 : vector<1x1x8x128xf32> to vector<8x128xf32>
    %129 = vector.shape_cast %126 : vector<8x128xf32> to vector<1x1x8x128xf32>
    tpu.vector_store %arg4[%c0_50, %c2_51, %c0_52, %c0_53], %129 {strides = array<i32>} : memref<1x6x8x128xf32, #tpu.memory_space<vmem>>, vector<1x1x8x128xf32>,
    %c0_54 = arith.constant 0 : index
    %c3 = arith.constant 3 : index
    %c0_55 = arith.constant 0 : index
    %c0_56 = arith.constant 0 : index
    %130 = vector.load %arg4[%c0_54, %c3, %c0_55, %c0_56] : memref<1x6x8x128xf32, #tpu.memory_space<vmem>>, vector<1x1x8x128xf32>
    %131 = vector.shape_cast %130 : vector<1x1x8x128xf32> to vector<8x128xf32>
    %132 = arith.addf %131, %104 : vector<8x128xf32>
    %c0_57 = arith.constant 0 : index
    %c3_58 = arith.constant 3 : index
    %c0_59 = arith.constant 0 : index
    %c0_60 = arith.constant 0 : index
    %133 = vector.load %arg4[%c0_57, %c3_58, %c0_59, %c0_60] : memref<1x6x8x128xf32, #tpu.memory_space<vmem>>, vector<1x1x8x128xf32>
    %134 = vector.shape_cast %133 : vector<1x1x8x128xf32> to vector<8x128xf32>
    %135 = vector.shape_cast %132 : vector<8x128xf32> to vector<1x1x8x128xf32>
    tpu.vector_store %arg4[%c0_57, %c3_58, %c0_59, %c0_60], %135 {strides = array<i32>} : memref<1x6x8x128xf32, #tpu.memory_space<vmem>>, vector<1x1x8x128xf32>,
    %c0_61 = arith.constant 0 : index
    %c4 = arith.constant 4 : index
    %c0_62 = arith.constant 0 : index
    %c0_63 = arith.constant 0 : index
    %136 = vector.load %arg4[%c0_61, %c4, %c0_62, %c0_63] : memref<1x6x8x128xf32, #tpu.memory_space<vmem>>, vector<1x1x8x128xf32>
    %137 = vector.shape_cast %136 : vector<1x1x8x128xf32> to vector<8x128xf32>
    %138 = arith.addf %137, %108 : vector<8x128xf32>
    %c0_64 = arith.constant 0 : index
    %c4_65 = arith.constant 4 : index
    %c0_66 = arith.constant 0 : index
    %c0_67 = arith.constant 0 : index
    %139 = vector.load %arg4[%c0_64, %c4_65, %c0_66, %c0_67] : memref<1x6x8x128xf32, #tpu.memory_space<vmem>>, vector<1x1x8x128xf32>
    %140 = vector.shape_cast %139 : vector<1x1x8x128xf32> to vector<8x128xf32>
    %141 = vector.shape_cast %138 : vector<8x128xf32> to vector<1x1x8x128xf32>
    tpu.vector_store %arg4[%c0_64, %c4_65, %c0_66, %c0_67], %141 {strides = array<i32>} : memref<1x6x8x128xf32, #tpu.memory_space<vmem>>, vector<1x1x8x128xf32>,
    %c0_68 = arith.constant 0 : index
    %c5 = arith.constant 5 : index
    %c0_69 = arith.constant 0 : index
    %c0_70 = arith.constant 0 : index
    %142 = vector.load %arg4[%c0_68, %c5, %c0_69, %c0_70] : memref<1x6x8x128xf32, #tpu.memory_space<vmem>>, vector<1x1x8x128xf32>
    %143 = vector.shape_cast %142 : vector<1x1x8x128xf32> to vector<8x128xf32>
    %144 = arith.addf %143, %111 : vector<8x128xf32>
    %c0_71 = arith.constant 0 : index
    %c5_72 = arith.constant 5 : index
    %c0_73 = arith.constant 0 : index
    %c0_74 = arith.constant 0 : index
    %145 = vector.load %arg4[%c0_71, %c5_72, %c0_73, %c0_74] : memref<1x6x8x128xf32, #tpu.memory_space<vmem>>, vector<1x1x8x128xf32>
    %146 = vector.shape_cast %145 : vector<1x1x8x128xf32> to vector<8x128xf32>
    %147 = vector.shape_cast %144 : vector<8x128xf32> to vector<1x1x8x128xf32>
    tpu.vector_store %arg4[%c0_71, %c5_72, %c0_73, %c0_74], %147 {strides = array<i32>} : memref<1x6x8x128xf32, #tpu.memory_space<vmem>>, vector<1x1x8x128xf32>,
    return
  }
  func.func @transform_0(%arg0: i32, %arg1: i32) -> (i32, i32) {
    %c1_i32 = arith.constant 1 : i32
    %0 = arith.muli %arg0, %c1_i32 : i32
    %1 = arith.addi %0, %arg1 : i32
    %c0_i32 = arith.constant 0 : i32
    %c0_i32_0 = arith.constant 0 : i32
    return %1, %c0_i32 : i32, i32
  }
  func.func @transform_1(%arg0: i32, %arg1: i32) -> (i32, i32) {
    %c1_i32 = arith.constant 1 : i32
    %0 = arith.muli %arg0, %c1_i32 : i32
    %1 = arith.addi %0, %arg1 : i32
    %c0_i32 = arith.constant 0 : i32
    %c0_i32_0 = arith.constant 0 : i32
    return %1, %c0_i32 : i32, i32
  }
  func.func @transform_2(%arg0: i32, %arg1: i32) -> (i32, i32, i32, i32) {
    %c0_i32 = arith.constant 0 : i32
    %c0_i32_0 = arith.constant 0 : i32
    %c0_i32_1 = arith.constant 0 : i32
    %c0_i32_2 = arith.constant 0 : i32
    return %arg0, %c0_i32, %c0_i32_0, %c0_i32_1 : i32, i32, i32, i32
  }
}

</mosaic_0001>

<llo_original>
// kernel: omni_comprehensive_loss.1
$region0: #{omni_comprehensive_loss.1}
  #allocation0 [shape = 'u32[]', space=smem, size = 0x4, offset = 0x4, fixed_abs, tag = 'smem constant byte address 0x4 - core index']
  #allocation1 [shape = 'u32[144,128]{1,0:T(1,128)}', space=vmem, size = 0x12000, scoped, tag = 'internal scratch']
  %s0 = inlined_call_operand.vmem [shape: f32[16,128], index: 0, kind: input, shape index: {}]
  %s1 = inlined_call_operand.vmem [shape: f32[16,128], index: 1, kind: input, shape index: {}]
  %s2 = inlined_call_operand.vmem [shape: f32[1,6,8,128], index: 2, kind: output, shape index: {}]
  %s3 = sld [smem:[#allocation0]]
  $region22: #{omni_comprehensive_loss.1} parent=0
    _
  %s5 = ssub.s32 1, %s3
  %s6 = scalar_select 0, %s5, %s3
  // Predicated region
  $region2: #{omni_comprehensive_loss.1} parent=0 // pred_check
    _
  $region3: #{omni_comprehensive_loss.1} parent=0 // pred_check_branch
    %8 = sbr.rel (0) target = $region5
  $region4: #{omni_comprehensive_loss.1} parent=0 // pred_region
    %s9 = sadd.s32 0, 0
    %s10 = smul.u32 2, %s9
    %p11 = scmp.lt.s32.totalorder %s10, 1
    %s12 = scalar_select %p11, %s10, 1
    %s13 = smul.addr %s12, 8
    %s14 = scalar_lea.vmem %s0, %s13
    %s15 = sadd.s32 0, 0
    %s16 = smul.u32 2, %s15
  $region5: #{omni_comprehensive_loss.1} parent=0 // pred_fallthru
    _
  // Predicated region
  $region6: #{omni_comprehensive_loss.1} parent=0 // pred_check
    _
  $region7: #{omni_comprehensive_loss.1} parent=0 // pred_check_branch
    %18 = sbr.rel (0) target = $region9
  $region8: #{omni_comprehensive_loss.1} parent=0 // pred_region
    %s19 = sadd.s32 0, 0
    %s20 = smul.u32 2, %s19
    %p21 = scmp.lt.s32.totalorder %s20, 1
    %s22 = scalar_select %p21, %s20, 1
    %s23 = smul.addr %s22, 8
    %s24 = scalar_lea.vmem %s1, %s23
    %s25 = sadd.s32 0, 0
    %s26 = smul.u32 2, %s25
  $region9: #{omni_comprehensive_loss.1} parent=0 // pred_fallthru
    _
  %s27 = sadd.s32 0, 0
  %s28 = smul.u32 2, %s27
  %p29 = scmp.lt.s32.totalorder %s28, 1
  %s30 = scalar_select %p29, %s28, 1
  %s31 = smul.addr %s30, 8
  %s32 = scalar_lea.vmem %s0, %s31
  %s33 = sadd.s32 0, 0
  %s34 = smul.u32 2, %s33
  %p35 = scmp.lt.s32.totalorder %s34, 1
  %s36 = scalar_select %p35, %s34, 1
  %s37 = smul.addr %s36, 8
  %s38 = scalar_lea.vmem %s1, %s37
  %s39 = sadd.s32 0, 0
  %s40 = smul.u32 2, %s39
  %p41 = scmp.lt.s32.totalorder %s40, 1
  %s42 = scalar_select %p41, %s40, 1
  %s43 = smul.addr %s42, 8
  %s44 = scalar_lea.vmem %s0, %s43
  %s45 = sadd.s32 0, 0
  %s46 = smul.u32 2, %s45
  %s47 = sadd.s32 0, 0
  %s48 = smul.u32 2, %s47
  %p49 = scmp.lt.s32.totalorder %s48, 1
  %s50 = scalar_select %p49, %s48, 1
  %s51 = smul.addr %s50, 8
  %s52 = scalar_lea.vmem %s1, %s51
  %s53 = sadd.s32 0, 0
  %s54 = smul.u32 2, %s53
  %p55 = scmp.eq.s32.totalorder 0, 0
  // Predicated region
  $region10: #{omni_comprehensive_loss.1} parent=0 // pred_check
    %p56 = pneg %p55
  $region11: #{omni_comprehensive_loss.1} parent=0 // pred_check_branch
    %58 = sbr.rel (%p56) target = $region13
  $region12: #{omni_comprehensive_loss.1} parent=0 // pred_region
    %59 = vst [vmem:[%s2] sm:$0xff] 0.0
    %60 = vst [vmem:[%s2 + $0x8] sm:$0xff] 0.0
    %61 = vst [vmem:[%s2 + $0x10] sm:$0xff] 0.0
    %62 = vst [vmem:[%s2 + $0x18] sm:$0xff] 0.0
    %63 = vst [vmem:[%s2 + $0x20] sm:$0xff] 0.0
    %64 = vst [vmem:[%s2 + $0x28] sm:$0xff] 0.0
  $region13: #{omni_comprehensive_loss.1} parent=0 // pred_fallthru
    _
  %v65 = vld [vmem:[%s44] sm:$0xff]
  %v66 = vld [vmem:[%s52] sm:$0xff]
  %v67 = vand.u32 2147483647, %v65
  %v68 = vsub.f32 0.0, %v67
  %v69 = vmul.f32 %v68, 1.442695
  %v70 = vpow.pop %v69
  %v71 = vadd.f32 %v70, 1.0
  %v72 = vlog2.pop %v71
  %v73 = vmul.f32 %v72, 0.6931472
  %v74 = vmul.f32 -0.5, %v70
  %v75 = vadd.f32 %v74, 1.0
  %v76 = vmul.f32 %v75, %v70
  %v77 = vand.u32 2147483647, %v70
  %vm78 = vcmp.lt.f32.partialorder %v77, 0.0004427343
  %v79 = vsel %vm78, %v76, %v73
  %v80 = vadd.f32 %v70, 1.0
  %v81 = vrcp.pop %v80
  %v82 = vmul.f32 %v80, %v81
  %v83 = vsub.f32 2.0, %v82
  %v84 = vmul.f32 %v81, %v83
  %vm85 = vcmp.ge.f32.partialorder %v65, 0.0
  %v86 = vmul.f32 %v70, %v84
  %v87 = vsel %vm85, %v84, %v86
  %v88 = vmax.f32 %v65, 0.0
  %v89 = vadd.f32 %v88, %v79
  %v90 = vsub.f32 %v89, %v65
  %v91 = vmin.f32 %v89, 100.0
  %v92 = vmin.f32 %v90, 100.0
  %v93 = vsub.f32 %v92, %v91
  %v94 = vmul.f32 %v66, %v93
  %v95 = vadd.f32 %v91, %v94
  %v96 = vadd.f32 %v87, 0.0
  %v97 = vadd.f32 %v96, 0.0
  %v98 = vadd.f32 %v66, 0.0
  %v99 = vadd.f32 %v98, 0.0
  %v100 = vmul.f32 %v87, %v66
  %v101 = vadd.f32 %v100, 0.0
  %v102 = vadd.f32 %v101, 0.0
  %v103 = vmul.f32 %v87, %v87
  %v104 = vadd.f32 %v103, 0.0
  %v105 = vadd.f32 %v104, 0.0
  %v106 = vmul.f32 %v66, %v66
  %v107 = vadd.f32 %v106, 0.0
  %v108 = vadd.f32 %v107, 0.0
  %v109 = vadd.f32 %v95, 0.0
  %v110 = vadd.f32 %v109, 0.0
  %s111 = scalar_lea.vmem %s44, 8
  %v112 = vld [vmem:[%s111] sm:$0xff]
  %s113 = scalar_lea.vmem %s52, 8
  %v114 = vld [vmem:[%s113] sm:$0xff]
  %v115 = vand.u32 2147483647, %v112
  %v116 = vsub.f32 0.0, %v115
  %v117 = vmul.f32 %v116, 1.442695
  %v118 = vpow.pop %v117
  %v119 = vadd.f32 %v118, 1.0
  %v120 = vlog2.pop %v119
  %v121 = vmul.f32 %v120, 0.6931472
  %v122 = vmul.f32 -0.5, %v118
  %v123 = vadd.f32 %v122, 1.0
  %v124 = vmul.f32 %v123, %v118
  %v125 = vand.u32 2147483647, %v118
  %vm126 = vcmp.lt.f32.partialorder %v125, 0.0004427343
  %v127 = vsel %vm126, %v124, %v121
  %v128 = vadd.f32 %v118, 1.0
  %v129 = vrcp.pop %v128
  %v130 = vmul.f32 %v128, %v129
  %v131 = vsub.f32 2.0, %v130
  %v132 = vmul.f32 %v129, %v131
  %vm133 = vcmp.ge.f32.partialorder %v112, 0.0
  %v134 = vmul.f32 %v118, %v132
  %v135 = vsel %vm133, %v132, %v134
  %v136 = vmax.f32 %v112, 0.0
  %v137 = vadd.f32 %v136, %v127
  %v138 = vsub.f32 %v137, %v112
  %v139 = vmin.f32 %v137, 100.0
  %v140 = vmin.f32 %v138, 100.0
  %v141 = vsub.f32 %v140, %v139
  %v142 = vmul.f32 %v114, %v141
  %v143 = vadd.f32 %v139, %v142
  %v144 = vadd.f32 %v135, 0.0
  %v145 = vadd.f32 %v97, %v144
  %v146 = vadd.f32 %v114, 0.0
  %v147 = vadd.f32 %v99, %v146
  %v148 = vmul.f32 %v135, %v114
  %v149 = vadd.f32 %v148, 0.0
  %v150 = vadd.f32 %v102, %v149
  %v151 = vmul.f32 %v135, %v135
  %v152 = vadd.f32 %v151, 0.0
  %v153 = vadd.f32 %v105, %v152
  %v154 = vmul.f32 %v114, %v114
  %v155 = vadd.f32 %v154, 0.0
  %v156 = vadd.f32 %v108, %v155
  %v157 = vadd.f32 %v143, 0.0
  %v158 = vadd.f32 %v110, %v157
  %v159 = vld [vmem:[%s2] sm:$0xff]
  %v160 = vadd.f32 %v159, %v145
  %161 = vst [vmem:[%s2] sm:$0xff] %v160
  %s162 = scalar_lea.vmem %s2, 8
  %v163 = vld [vmem:[%s162] sm:$0xff]
  %v164 = vadd.f32 %v163, %v147
  %165 = vst [vmem:[%s162] sm:$0xff] %v164
  %s166 = scalar_lea.vmem %s2, 16
  %v167 = vld [vmem:[%s166] sm:$0xff]
  %v168 = vadd.f32 %v167, %v150
  %169 = vst [vmem:[%s166] sm:$0xff] %v168
  %s170 = scalar_lea.vmem %s2, 24
  %v171 = vld [vmem:[%s170] sm:$0xff]
  %v172 = vadd.f32 %v171, %v153
  %173 = vst [vmem:[%s170] sm:$0xff] %v172
  %s174 = scalar_lea.vmem %s2, 32
  %v175 = vld [vmem:[%s174] sm:$0xff]
  %v176 = vadd.f32 %v175, %v156
  %177 = vst [vmem:[%s174] sm:$0xff] %v176
  %s178 = scalar_lea.vmem %s2, 40
  %v179 = vld [vmem:[%s178] sm:$0xff]
  %v180 = vadd.f32 %v179, %v158
  %181 = vst [vmem:[%s178] sm:$0xff] %v180
  // Predicated region
  $region14: #{omni_comprehensive_loss.1} parent=0 // pred_check
    _
  $region15: #{omni_comprehensive_loss.1} parent=0 // pred_check_branch
    %183 = sbr.rel (0) target = $region17
  $region16: #{omni_comprehensive_loss.1} parent=0 // pred_region
    _
  $region17: #{omni_comprehensive_loss.1} parent=0 // pred_fallthru
    _
  // Predicated region
  $region18: #{omni_comprehensive_loss.1} parent=0 // pred_check
    _
  $region19: #{omni_comprehensive_loss.1} parent=0 // pred_check_branch
    %185 = sbr.rel (0) target = $region21
  $region20: #{omni_comprehensive_loss.1} parent=0 // pred_region
    _
  $region21: #{omni_comprehensive_loss.1} parent=0 // pred_fallthru
    _

</llo_original>
